<compile_context>
chip_gen: v7x
topology: tpu7x:2x2x1
jax: 0.10.0
libtpu: 0.0.40
codegen_flags: <defaults>
</compile_context>

<pallas_src>
import jax
import jax.numpy as jnp
from jax.experimental import pallas as pl
from jax.experimental.pallas import tpu as pltpu

_SUBLANE = 8
_MEGACORE_SPLIT_ROWS = 1024   # above this many rows, prefer >=2 grid steps


def _round_up(x, m):
    return ((x + m - 1) // m) * m


def _bf16_eup_ok():
    """bf16 tanh is profitable on v6e/v7x; v5e and older lack a bf16 EUP."""
    try:
        kind = jax.devices()[0].device_kind.lower()
    except Exception:
        return False
    if "tpu" not in kind:
        return False
    return not any(old in kind for old in ("v2", "v3", "v4", "v5"))


def _make_mlp_kernel(num_linear_layers: int, bf16_tanh: bool):
    """Kernel for `num_linear_layers` Linear layers.

    The last layer is the readout (no activation); all earlier layers are
    followed by tanh, matching Feedforward.forward.
    """

    def kernel(*refs):
        x_ref = refs[0]
        param_refs = refs[1:-1]          # alternating (w, b) pairs
        o_ref = refs[-1]

        h = x_ref[...]                   # f32 activation tile [TM, in]
        for i in range(num_linear_layers):
            w = param_refs[2 * i][...]       # bf16 [in, out] (resident)
            b = param_refs[2 * i + 1][...]   # f32  [1, out]  (resident)
            # bf16 MXU operands, f32 accumulation; bias add in f32.
            h = jnp.dot(h.astype(w.dtype), w,
                        preferred_element_type=jnp.float32) + b
            if i < num_linear_layers - 1:
                # tanh in bf16 where the EUP supports it (the activation is
                # cast to bf16 for the next matmul anyway); f32 on v5e/older.
                h = jnp.tanh(h.astype(jnp.bfloat16) if bf16_tanh else h)
        o_ref[...] = h.astype(o_ref.dtype)

    return kernel


def prepare_params(params):
    """One-time cast of parameters to their kernel dtypes (bf16 W, f32 b)."""
    return [(jnp.asarray(w, jnp.bfloat16),
             jnp.asarray(b, jnp.float32).reshape(1, -1))
            for w, b in params]


def _choose_batch_tile(batch, block_m):
    """Fewest grid steps with tiles <= block_m rows and minimal batch padding."""
    padded = _round_up(batch, _SUBLANE)
    n_steps = max(1, -(-padded // block_m))            # ceil-div
    if n_steps == 1 and padded >= _MEGACORE_SPLIT_ROWS:
        n_steps = 2                                    # keep both v7x TCs busy
    tm = _round_up(-(-padded // n_steps), _SUBLANE)
    return tm, tm * n_steps


def feedforward_pallas(x, params, *, block_m=1024):
    """Run the MLP forward pass in a single batch-tiled Pallas kernel.

    x:      [batch, input_size] float32
    params: list of (w, b) with w: [in, out], b: [1, out] (ideally pre-cast
            via prepare_params; cast here only if needed).
    """
    batch, input_size = x.shape
    num_layers = len(params)
    out_dim = params[-1][0].shape[1]

    # Params resident in VMEM: bf16 weights, f32 biases (idempotent cast).
    packed = []
    for w, b in params:
        w = w if w.dtype == jnp.bfloat16 else w.astype(jnp.bfloat16)
        b = b.reshape(1, -1)
        b = b if b.dtype == jnp.float32 else b.astype(jnp.float32)
        packed.append((w, b))

    # Batch tiling: few big tiles, minimal padding.
    block_m = _round_up(max(block_m, _SUBLANE), _SUBLANE)
    tm, padded_batch = _choose_batch_tile(batch, block_m)
    x = x.astype(jnp.float32)
    if padded_batch != batch:
        x = jnp.pad(x, ((0, padded_batch - batch), (0, 0)))
    grid = (padded_batch // tm,)

    # x / out are tiled along batch; weights & biases are kept resident
    # across grid steps via constant index_maps (DMA'd once, no re-copy).
    in_specs = [pl.BlockSpec((tm, input_size), lambda i: (i, 0))]
    for w, b in packed:
        in_specs.append(pl.BlockSpec(w.shape, lambda i: (0, 0)))
        in_specs.append(pl.BlockSpec(b.shape, lambda i: (0, 0)))
    # Output block: last dim == full array dim, so no 128-lane padding and
    # no wrapper-side re-read of a padded output.
    out_spec = pl.BlockSpec((tm, out_dim), lambda i: (i, 0))

    flat_args = [x]
    for w, b in packed:
        flat_args.append(w)
        flat_args.append(b)

    flops = 2 * padded_batch * sum(w.shape[0] * w.shape[1] for w, _ in packed)
    transcendentals = padded_batch * sum(w.shape[1] for w, _ in packed[:-1])
    bytes_accessed = int(
        padded_batch * input_size * 4                       # f32 x in
        + sum(w.size * 2 + b.size * 4 for w, b in packed)   # weights + biases
        + padded_batch * out_dim * 4)                       # f32 output

    kernel = _make_mlp_kernel(num_layers, _bf16_eup_ok())

    # TODO(synk): once hidden sizes reach ~4k, single-buffer the resident
    # params (pipeline_mode=pl.Buffered(1)) and set vmem_limit_bytes for v7x
    # (64 MiB physical); at hidden=32 the params are <10 KB so defaults hold.
    out = pl.pallas_call(
        kernel,
        out_shape=jax.ShapeDtypeStruct((padded_batch, out_dim), jnp.float32),
        grid=grid,
        in_specs=in_specs,
        out_specs=out_spec,
        compiler_params=pltpu.CompilerParams(
            dimension_semantics=("parallel",)),
        cost_estimate=pl.CostEstimate(
            flops=flops,
            transcendentals=transcendentals,
            bytes_accessed=bytes_accessed),
    )(*flat_args)

    return out[:batch] if padded_batch != batch else out


def init_params(key, input_size, hidden_sizes, output_size):
    """Deterministic init mirroring PyTorch Linear's default U(-1/sqrt(in), 1/sqrt(in))."""
    layer_sizes = [input_size] + list(hidden_sizes) + [output_size]
    params = []
    for fan_in, fan_out in zip(layer_sizes[:-1], layer_sizes[1:]):
        key, kw, kb = jax.random.split(key, 3)
        bound = 1.0 / jnp.sqrt(jnp.float32(fan_in))
        w = jax.random.uniform(kw, (fan_in, fan_out), jnp.float32, -bound, bound)
        b = jax.random.uniform(kb, (1, fan_out), jnp.float32, -bound, bound)
        params.append((w, b))
    return params


def feedforward_ref_f32(x, params):
    """Pure-JAX f32 reference (module semantics)."""
    h = x
    for i, (w, b) in enumerate(params):
        h = h @ w + b.reshape(1, -1)
        if i < len(params) - 1:
            h = jnp.tanh(h)
    return h


def feedforward_ref_matched(x, params, bf16_tanh):
    """Pure-JAX reference using the same numerics as the kernel
    (bf16 MXU operands, f32 accumulation/bias, generation-gated tanh dtype)."""
    h = x.astype(jnp.float32)
    for i, (w, b) in enumerate(params):
        h = jnp.dot(h.astype(jnp.bfloat16), w.astype(jnp.bfloat16),
                    preferred_element_type=jnp.float32) \
            + b.reshape(1, -1).astype(jnp.float32)
        if i < len(params) - 1:
            h = jnp.tanh(h.astype(jnp.bfloat16) if bf16_tanh else h)
    return h


if __name__ == "__main__":
    # Small shapes consistent with a hockey-env style MLP:
    #   input_size=18 observations, two hidden layers of 32, 4 outputs.
    input_size = 18
    hidden_sizes = [32, 32]
    output_size = 4
    batch = 8

    key = jax.random.PRNGKey(0)
    key, kx = jax.random.split(key)
    x = jax.random.normal(kx, (batch, input_size), jnp.float32)
    params = init_params(key, input_size, hidden_sizes, output_size)
    kernel_params = prepare_params(params)   # one-time dtype cast (outside hot path)

    out = feedforward_pallas(x, kernel_params)
    out = jax.block_until_ready(out)
    assert out.shape == (batch, output_size)

    # Exact-numerics reference (bf16 MXU path) and loose f32-module reference.
    ref_matched = feedforward_ref_matched(x, params, _bf16_eup_ok())
    ref_f32 = feedforward_ref_f32(x, params)
    assert jnp.allclose(out, ref_matched, atol=5e-3, rtol=5e-3), \
        "mismatch vs bf16-matched reference"
    assert jnp.allclose(out, ref_f32, atol=5e-2, rtol=5e-2), \
        "mismatch vs f32 reference"

    print("KERNEL_OK")
</pallas_src>

<mosaic_0001>
module attributes {stable_mosaic.version = 11 : i64} {
  func.func @kernel(%arg0: i32, %arg1: memref<8x18xf32, #tpu.memory_space<vmem>>, %arg2: memref<18x32xbf16, #tpu.memory_space<vmem>>, %arg3: memref<1x32xf32, #tpu.memory_space<vmem>>, %arg4: memref<32x32xbf16, #tpu.memory_space<vmem>>, %arg5: memref<1x32xf32, #tpu.memory_space<vmem>>, %arg6: memref<32x4xbf16, #tpu.memory_space<vmem>>, %arg7: memref<1x4xf32, #tpu.memory_space<vmem>>, %arg8: memref<8x4xf32, #tpu.memory_space<vmem>>) attributes {dimension_semantics = [#tpu.dimension_semantics<parallel>], iteration_bounds = array<i64: 1>, scalar_prefetch = 0 : i64, scratch_operands = 0 : i64, tpu.core_type = #tpu.core_type<tc>, window_params = [{transform_indices = @transform_0, window_bounds = array<i64: 8, 18>}, {pipeline_mode = #tpu.pipeline_mode<synchronous>, transform_indices = @transform_1, window_bounds = array<i64: 18, 32>}, {pipeline_mode = #tpu.pipeline_mode<synchronous>, transform_indices = @transform_2, window_bounds = array<i64: 1, 32>}, {pipeline_mode = #tpu.pipeline_mode<synchronous>, transform_indices = @transform_3, window_bounds = array<i64: 32, 32>}, {pipeline_mode = #tpu.pipeline_mode<synchronous>, transform_indices = @transform_4, window_bounds = array<i64: 1, 32>}, {pipeline_mode = #tpu.pipeline_mode<synchronous>, transform_indices = @transform_5, window_bounds = array<i64: 32, 4>}, {pipeline_mode = #tpu.pipeline_mode<synchronous>, transform_indices = @transform_6, window_bounds = array<i64: 1, 4>}, {transform_indices = @transform_7, window_bounds = array<i64: 8, 4>}]} {
    %c0 = arith.constant 0 : index
    %c0_0 = arith.constant 0 : index
    %0 = vector.load %arg1[%c0, %c0_0] : memref<8x18xf32, #tpu.memory_space<vmem>>, vector<8x18xf32>
    %c0_1 = arith.constant 0 : index
    %c0_2 = arith.constant 0 : index
    %1 = vector.load %arg2[%c0_1, %c0_2] : memref<18x32xbf16, #tpu.memory_space<vmem>>, vector<18x32xbf16>
    %c0_3 = arith.constant 0 : index
    %c0_4 = arith.constant 0 : index
    %2 = vector.load %arg3[%c0_3, %c0_4] : memref<1x32xf32, #tpu.memory_space<vmem>>, vector<1x32xf32>
    %3 = arith.truncf %0 : vector<8x18xf32> to vector<8x18xbf16>
    %cst = arith.constant dense<0.000000e+00> : vector<8x32xf32>
    %4 = tpu.matmul %3, %1, %cst {dimension_numbers = #tpu.dot_dimension_numbers<[1], [0], [0], [1], [0, 0, 1, 1], [], []>} : vector<8x18xbf16>, vector<18x32xbf16>, vector<8x32xf32> -> vector<8x32xf32>
    %5 = vector.broadcast %2 : vector<1x32xf32> to vector<8x32xf32>
    %6 = arith.addf %4, %5 : vector<8x32xf32>
    %7 = math.tanh %6 : vector<8x32xf32>
    %c0_5 = arith.constant 0 : index
    %c0_6 = arith.constant 0 : index
    %8 = vector.load %arg4[%c0_5, %c0_6] : memref<32x32xbf16, #tpu.memory_space<vmem>>, vector<32x32xbf16>
    %c0_7 = arith.constant 0 : index
    %c0_8 = arith.constant 0 : index
    %9 = vector.load %arg5[%c0_7, %c0_8] : memref<1x32xf32, #tpu.memory_space<vmem>>, vector<1x32xf32>
    %10 = arith.truncf %7 : vector<8x32xf32> to vector<8x32xbf16>
    %cst_9 = arith.constant dense<0.000000e+00> : vector<8x32xf32>
    %11 = tpu.matmul %10, %8, %cst_9 {dimension_numbers = #tpu.dot_dimension_numbers<[1], [0], [0], [1], [0, 0, 1, 1], [], []>} : vector<8x32xbf16>, vector<32x32xbf16>, vector<8x32xf32> -> vector<8x32xf32>
    %12 = vector.broadcast %9 : vector<1x32xf32> to vector<8x32xf32>
    %13 = arith.addf %11, %12 : vector<8x32xf32>
    %14 = math.tanh %13 : vector<8x32xf32>
    %c0_10 = arith.constant 0 : index
    %c0_11 = arith.constant 0 : index
    %15 = vector.load %arg6[%c0_10, %c0_11] : memref<32x4xbf16, #tpu.memory_space<vmem>>, vector<32x4xbf16>
    %c0_12 = arith.constant 0 : index
    %c0_13 = arith.constant 0 : index
    %16 = vector.load %arg7[%c0_12, %c0_13] : memref<1x4xf32, #tpu.memory_space<vmem>>, vector<1x4xf32>
    %17 = arith.truncf %14 : vector<8x32xf32> to vector<8x32xbf16>
    %cst_14 = arith.constant dense<0.000000e+00> : vector<8x4xf32>
    %18 = tpu.matmul %17, %15, %cst_14 {dimension_numbers = #tpu.dot_dimension_numbers<[1], [0], [0], [1], [0, 0, 1, 1], [], []>} : vector<8x32xbf16>, vector<32x4xbf16>, vector<8x4xf32> -> vector<8x4xf32>
    %19 = vector.broadcast %16 : vector<1x4xf32> to vector<8x4xf32>
    %20 = arith.addf %18, %19 : vector<8x4xf32>
    %c0_15 = arith.constant 0 : index
    %c0_16 = arith.constant 0 : index
    %21 = vector.load %arg8[%c0_15, %c0_16] : memref<8x4xf32, #tpu.memory_space<vmem>>, vector<8x4xf32>
    tpu.vector_store %arg8[%c0_15, %c0_16], %20 {strides = array<i32>} : memref<8x4xf32, #tpu.memory_space<vmem>>, vector<8x4xf32>,
    return
  }
  func.func @transform_0(%arg0: i32) -> (i32, i32) {
    %c0_i32 = arith.constant 0 : i32
    %c0_i32_0 = arith.constant 0 : i32
    return %arg0, %c0_i32 : i32, i32
  }
  func.func @transform_1(%arg0: i32) -> (i32, i32) {
    %c0_i32 = arith.constant 0 : i32
    %c0_i32_0 = arith.constant 0 : i32
    %c0_i32_1 = arith.constant 0 : i32
    return %c0_i32, %c0_i32_0 : i32, i32
  }
  func.func @transform_2(%arg0: i32) -> (i32, i32) {
    %c0_i32 = arith.constant 0 : i32
    %c0_i32_0 = arith.constant 0 : i32
    %c0_i32_1 = arith.constant 0 : i32
    return %c0_i32, %c0_i32_0 : i32, i32
  }
  func.func @transform_3(%arg0: i32) -> (i32, i32) {
    %c0_i32 = arith.constant 0 : i32
    %c0_i32_0 = arith.constant 0 : i32
    %c0_i32_1 = arith.constant 0 : i32
    return %c0_i32, %c0_i32_0 : i32, i32
  }
  func.func @transform_4(%arg0: i32) -> (i32, i32) {
    %c0_i32 = arith.constant 0 : i32
    %c0_i32_0 = arith.constant 0 : i32
    %c0_i32_1 = arith.constant 0 : i32
    return %c0_i32, %c0_i32_0 : i32, i32
  }
  func.func @transform_5(%arg0: i32) -> (i32, i32) {
    %c0_i32 = arith.constant 0 : i32
    %c0_i32_0 = arith.constant 0 : i32
    %c0_i32_1 = arith.constant 0 : i32
    return %c0_i32, %c0_i32_0 : i32, i32
  }
  func.func @transform_6(%arg0: i32) -> (i32, i32) {
    %c0_i32 = arith.constant 0 : i32
    %c0_i32_0 = arith.constant 0 : i32
    %c0_i32_1 = arith.constant 0 : i32
    return %c0_i32, %c0_i32_0 : i32, i32
  }
  func.func @transform_7(%arg0: i32) -> (i32, i32) {
    %c0_i32 = arith.constant 0 : i32
    %c0_i32_0 = arith.constant 0 : i32
    return %arg0, %c0_i32 : i32, i32
  }
}

</mosaic_0001>

<llo_original>
// kernel: tpu_custom_call.1
$region0: #{tpu_custom_call.1}
  #allocation0 [shape = 'u32[]', space=smem, size = 0x4, offset = 0x4, fixed_abs, tag = 'smem constant byte address 0x4 - core index']
  #allocation1 [shape = 'u32[144,128]{1,0:T(1,128)}', space=vmem, size = 0x12000, scoped, tag = 'internal scratch']
  %s0 = inlined_call_operand.hbm [shape: f32[8,18], index: 0, kind: input, shape index: {}]
  %s1 = inlined_call_operand.vmem [shape: bf16[18,32], index: 1, kind: input, shape index: {}]
  %s2 = inlined_call_operand.vmem [shape: f32[1,32], index: 2, kind: input, shape index: {}]
  %s3 = inlined_call_operand.vmem [shape: bf16[32,32], index: 3, kind: input, shape index: {}]
  %s4 = inlined_call_operand.vmem [shape: f32[1,32], index: 4, kind: input, shape index: {}]
  %s5 = inlined_call_operand.vmem [shape: bf16[32,4], index: 5, kind: input, shape index: {}]
  %s6 = inlined_call_operand.vmem [shape: f32[1,4], index: 6, kind: input, shape index: {}]
  %s7 = inlined_call_operand.vmem [shape: f32[8,4], index: 7, kind: output, shape index: {}]
  %s8 = sld [smem:[#allocation0]]
  $region42: #{tpu_custom_call.1} parent=0
    _
  %s10 = ssub.s32 1, %s8
  %s11 = scalar_select 0, %s10, %s8
  $region1: #{tpu_custom_call.1} parent=0
    #allocation2 [shape = 'u8[4096]{0}', space=vmem, size = 0x1000, scoped, tag = 'input window, operand 0, single buffered']
    #allocation3 [shape = 's32[1]{0}', space=sflag, size = 0x4, scoped, tag = 'scoped memory for tpu_custom_call.1']
    %12 = vsyncpa [#allocation3], 0
    // Predicated region
    $region2: #{tpu_custom_call.1} parent=1 // pred_check
      _
    $region3: #{tpu_custom_call.1} parent=1 // pred_check_branch
      %14 = sbr.rel (0) target = $region5
    $region4: #{tpu_custom_call.1} parent=1 // pred_region
      %s16 = ssub.s32 128, 128
      %17 = vsyncadd [#allocation3], %s16
      %s19 = sshll.u32 [#allocation2], 4
      %s20 = int_to_ptr.vmem [resolvable:$true] %s19
      %22 = dma.hbm_to_vmem [thread:$0]  %s0, 128, %s20, [#allocation3]
    $region5: #{tpu_custom_call.1} parent=1 // pred_fallthru
      _
    // Predicated region
    $region6: #{tpu_custom_call.1} parent=1 // pred_check
      _
    $region7: #{tpu_custom_call.1} parent=1 // pred_check_branch
      %24 = sbr.rel (0) target = $region9
    $region8: #{tpu_custom_call.1} parent=1 // pred_region
      _
    $region9: #{tpu_custom_call.1} parent=1 // pred_fallthru
      _
    // Predicated region
    $region10: #{tpu_custom_call.1} parent=1 // pred_check
      _
    $region11: #{tpu_custom_call.1} parent=1 // pred_check_branch
      %26 = sbr.rel (0) target = $region13
    $region12: #{tpu_custom_call.1} parent=1 // pred_region
      _
    $region13: #{tpu_custom_call.1} parent=1 // pred_fallthru
      _
    // Predicated region
    $region14: #{tpu_custom_call.1} parent=1 // pred_check
      _
    $region15: #{tpu_custom_call.1} parent=1 // pred_check_branch
      %28 = sbr.rel (0) target = $region17
    $region16: #{tpu_custom_call.1} parent=1 // pred_region
      _
    $region17: #{tpu_custom_call.1} parent=1 // pred_fallthru
      _
    // Predicated region
    $region18: #{tpu_custom_call.1} parent=1 // pred_check
      _
    $region19: #{tpu_custom_call.1} parent=1 // pred_check_branch
      %30 = sbr.rel (0) target = $region21
    $region20: #{tpu_custom_call.1} parent=1 // pred_region
      _
    $region21: #{tpu_custom_call.1} parent=1 // pred_fallthru
      _
    // Predicated region
    $region22: #{tpu_custom_call.1} parent=1 // pred_check
      _
    $region23: #{tpu_custom_call.1} parent=1 // pred_check_branch
      %32 = sbr.rel (0) target = $region25
    $region24: #{tpu_custom_call.1} parent=1 // pred_region
      _
    $region25: #{tpu_custom_call.1} parent=1 // pred_fallthru
      _
    // Predicated region
    $region26: #{tpu_custom_call.1} parent=1 // pred_check
      _
    $region27: #{tpu_custom_call.1} parent=1 // pred_check_branch
      %34 = sbr.rel (0) target = $region29
    $region28: #{tpu_custom_call.1} parent=1 // pred_region
      _
    $region29: #{tpu_custom_call.1} parent=1 // pred_fallthru
      _
    // Predicated region
    $region30: #{tpu_custom_call.1} parent=1 // pred_check
      _
    $region31: #{tpu_custom_call.1} parent=1 // pred_check_branch
      %36 = sbr.rel (0) target = $region33
    $region32: #{tpu_custom_call.1} parent=1 // pred_region
      %37 = dma.done [#allocation3], 128
    $region33: #{tpu_custom_call.1} parent=1 // pred_fallthru
      _
    %v39 = vld [vmem:[#allocation2] sm:$0xff]
    %v40 = vld [vmem:[%s1] sm:$0xf]
    %v41 = vld [vmem:[%s1 + $0x4] sm:$0xf]
    %v42 = vld [vmem:[%s1 + $0x8] sm:$0x1]
    %v43 = vld [vmem:[%s2] sm:$0x1]
    %v44 = vpack.c.bf16 %v39, %v39
    %v46 = vlaneseq
    %v47 = vshrl.u32 %v46, 7
    %v48 = vsub.s32 0, %v47
    %v49 = vrot.slane %v43, %v48
    %v54 = vunpack.c.l.b16 %v40
    %v55 = vunpack.c.l.b16 %v41
    %v56 = vunpack.c.l.b16 %v42
    %v57 = vpack.c.b16 %v55, %v54
    %v58 = vpack.c.b16 %v56, %v56
    %vm60 = vcmask 146432
    %v62 = vsel %vm60, %v44, 0
    %vm64 = vcmask 1040384
    %v66 = vsel %vm64, %v58, 0
    %68 = vmatprep.subr.bf16.mxu0 0
    %69 = vmatpush1.bf16.msra.mxu0 %v57
    %70 = vmatprep.subr.bf16.mxu0 0
    %71 = vmatpush1.bf16.msra.mxu0 %v66
    %72 = vmatprep.subr.bf16.mxu0 0
    %73 = vmatpush1.bf16.msra.mxu0 0
    %74 = vmatprep.subr.bf16.mxu0 0
    %75 = vmatpush1.bf16.msra.mxu0 0
    %76 = vmatprep.subr.bf16.mxu0 0
    %77 = vmatpush1.bf16.msra.mxu0 0
    %78 = vmatprep.subr.bf16.mxu0 0
    %79 = vmatpush1.bf16.msra.mxu0 0
    %80 = vmatprep.subr.bf16.mxu0 0
    %81 = vmatpush1.bf16.msra.mxu0 0
    %82 = vmatprep.subr.bf16.mxu0 0
    %83 = vmatpush1.bf16.msra.mxu0 0
    %84 = vmatprep.subr.bf16.mxu0 0
    %85 = vmatpush1.bf16.msra.mxu0 0
    %86 = vmatprep.subr.bf16.mxu0 0
    %87 = vmatpush1.bf16.msra.mxu0 0
    %88 = vmatprep.subr.bf16.mxu0 0
    %89 = vmatpush1.bf16.msra.mxu0 0
    %90 = vmatprep.subr.bf16.mxu0 0
    %91 = vmatpush1.bf16.msra.mxu0 0
    %92 = vmatprep.subr.bf16.mxu0 0
    %93 = vmatpush1.bf16.msra.mxu0 0
    %94 = vmatprep.subr.bf16.mxu0 0
    %95 = vmatpush1.bf16.msra.mxu0 0
    %96 = vmatprep.subr.bf16.mxu0 0
    %97 = vmatpush1.bf16.msra.mxu0 0
    %98 = vmatprep.subr.bf16.mxu0 0
    %99 = vmatpush1.bf16.msra.mxu0 0
    %100 = vmatprep.mubr.bf16.mxu0 0
    %101 = vmatmul.mubr.bf16.gmra.mrb[0].mxu0 %v62
    %v102 = vpop.f32.mrb[0].mxu0
    %v103 = vadd.f32 %v49, %v102
    %v104 = vpop.f32.mrb[0].mxu0
    %v105 = vpop.f32.mrb[0].mxu0
    %v106 = vpop.f32.mrb[0].mxu0
    %107 = vdwg.mxu0
    %v108 = vtanh.pop %v103
    %v109 = vld [vmem:[%s3] sm:$0xf]
    %v110 = vld [vmem:[%s3 + $0x4] sm:$0xf]
    %v111 = vld [vmem:[%s3 + $0x8] sm:$0xf]
    %v112 = vld [vmem:[%s3 + $0xc] sm:$0xf]
    %v113 = vld [vmem:[%s4] sm:$0x1]
    %v114 = vpack.c.bf16 %v108, %v108
    %v116 = vlaneseq
    %v117 = vshrl.u32 %v116, 7
    %v118 = vsub.s32 0, %v117
    %v119 = vrot.slane %v113, %v118
    %v125 = vunpack.c.l.b16 %v109
    %v126 = vunpack.c.l.b16 %v110
    %v127 = vunpack.c.l.b16 %v111
    %v128 = vunpack.c.l.b16 %v112
    %v129 = vpack.c.b16 %v126, %v125
    %v130 = vpack.c.b16 %v128, %v127
    %vm133 = vcmask 261120
    %v135 = vsel %vm133, %v114, 0
    %137 = vmatprep.subr.bf16.mxu0 0
    %138 = vmatpush1.bf16.msra.mxu0 %v129
    %139 = vmatprep.subr.bf16.mxu0 0
    %140 = vmatpush1.bf16.msra.mxu0 %v130
    %141 = vmatprep.subr.bf16.mxu0 0
    %142 = vmatpush1.bf16.msra.mxu0 0
    %143 = vmatprep.subr.bf16.mxu0 0
    %144 = vmatpush1.bf16.msra.mxu0 0
    %145 = vmatprep.subr.bf16.mxu0 0
    %146 = vmatpush1.bf16.msra.mxu0 0
    %147 = vmatprep.subr.bf16.mxu0 0
    %148 = vmatpush1.bf16.msra.mxu0 0
    %149 = vmatprep.subr.bf16.mxu0 0
    %150 = vmatpush1.bf16.msra.mxu0 0
    %151 = vmatprep.subr.bf16.mxu0 0
    %152 = vmatpush1.bf16.msra.mxu0 0
    %153 = vmatprep.subr.bf16.mxu0 0
    %154 = vmatpush1.bf16.msra.mxu0 0
    %155 = vmatprep.subr.bf16.mxu0 0
    %156 = vmatpush1.bf16.msra.mxu0 0
    %157 = vmatprep.subr.bf16.mxu0 0
    %158 = vmatpush1.bf16.msra.mxu0 0
    %159 = vmatprep.subr.bf16.mxu0 0
    %160 = vmatpush1.bf16.msra.mxu0 0
    %161 = vmatprep.subr.bf16.mxu0 0
    %162 = vmatpush1.bf16.msra.mxu0 0
    %163 = vmatprep.subr.bf16.mxu0 0
    %164 = vmatpush1.bf16.msra.mxu0 0
    %165 = vmatprep.subr.bf16.mxu0 0
    %166 = vmatpush1.bf16.msra.mxu0 0
    %167 = vmatprep.subr.bf16.mxu0 0
    %168 = vmatpush1.bf16.msra.mxu0 0
    %169 = vmatprep.mubr.bf16.mxu0 0
    %170 = vmatmul.mubr.bf16.gmra.mrb[0].mxu0 %v135
    %v171 = vpop.f32.mrb[0].mxu0
    %v172 = vadd.f32 %v119, %v171
    %v173 = vpop.f32.mrb[0].mxu0
    %v174 = vpop.f32.mrb[0].mxu0
    %v175 = vpop.f32.mrb[0].mxu0
    %176 = vdwg.mxu0
    %v177 = vtanh.pop %v172
    %v178 = vld [vmem:[%s5] sm:$0xf]
    %v179 = vld [vmem:[%s5 + $0x4] sm:$0xf]
    %v180 = vld [vmem:[%s5 + $0x8] sm:$0xf]
    %v181 = vld [vmem:[%s5 + $0xc] sm:$0xf]
    %v182 = vld [vmem:[%s6] sm:$0x1]
    %v183 = vpack.c.bf16 %v177, %v177
    %v185 = vlaneseq
    %v186 = vshrl.u32 %v185, 7
    %v187 = vsub.s32 0, %v186
    %v188 = vrot.slane %v182, %v187
    %v194 = vunpack.c.l.b16 %v178
    %v195 = vunpack.c.l.b16 %v179
    %v196 = vunpack.c.l.b16 %v180
    %v197 = vunpack.c.l.b16 %v181
    %v198 = vpack.c.b16 %v195, %v194
    %v199 = vpack.c.b16 %v197, %v196
    %v203 = vsel %vm133, %v183, 0
    %205 = vmatprep.subr.bf16.mxu0 0
    %206 = vmatpush1.bf16.msra.mxu0 %v198
    %207 = vmatprep.subr.bf16.mxu0 0
    %208 = vmatpush1.bf16.msra.mxu0 %v199
    %209 = vmatprep.subr.bf16.mxu0 0
    %210 = vmatpush1.bf16.msra.mxu0 0
    %211 = vmatprep.subr.bf16.mxu0 0
    %212 = vmatpush1.bf16.msra.mxu0 0
    %213 = vmatprep.subr.bf16.mxu0 0
    %214 = vmatpush1.bf16.msra.mxu0 0
    %215 = vmatprep.subr.bf16.mxu0 0
    %216 = vmatpush1.bf16.msra.mxu0 0
    %217 = vmatprep.subr.bf16.mxu0 0
    %218 = vmatpush1.bf16.msra.mxu0 0
    %219 = vmatprep.subr.bf16.mxu0 0
    %220 = vmatpush1.bf16.msra.mxu0 0
    %221 = vmatprep.subr.bf16.mxu0 0
    %222 = vmatpush1.bf16.msra.mxu0 0
    %223 = vmatprep.subr.bf16.mxu0 0
    %224 = vmatpush1.bf16.msra.mxu0 0
    %225 = vmatprep.subr.bf16.mxu0 0
    %226 = vmatpush1.bf16.msra.mxu0 0
    %227 = vmatprep.subr.bf16.mxu0 0
    %228 = vmatpush1.bf16.msra.mxu0 0
    %229 = vmatprep.subr.bf16.mxu0 0
    %230 = vmatpush1.bf16.msra.mxu0 0
    %231 = vmatprep.subr.bf16.mxu0 0
    %232 = vmatpush1.bf16.msra.mxu0 0
    %233 = vmatprep.subr.bf16.mxu0 0
    %234 = vmatpush1.bf16.msra.mxu0 0
    %235 = vmatprep.subr.bf16.mxu0 0
    %236 = vmatpush1.bf16.msra.mxu0 0
    %237 = vmatprep.mubr.bf16.mxu0 0
    %238 = vmatmul.mubr.bf16.gmra.mrb[0].mxu0 %v203
    %v239 = vpop.f32.mrb[0].mxu0
    %v240 = vadd.f32 %v188, %v239
    %v241 = vpop.f32.mrb[0].mxu0
    %v242 = vpop.f32.mrb[0].mxu0
    %v243 = vpop.f32.mrb[0].mxu0
    %244 = vdwg.mxu0
    %vm245 = vcmask 31744
    %246 = vst.msk [vmem:[%s7] sm:$0xff] %vm245, %v240
    // Predicated region
    $region34: #{tpu_custom_call.1} parent=1 // pred_check
      _
    $region35: #{tpu_custom_call.1} parent=1 // pred_check_branch
      %248 = sbr.rel (0) target = $region37
    $region36: #{tpu_custom_call.1} parent=1 // pred_region
      _
    $region37: #{tpu_custom_call.1} parent=1 // pred_fallthru
      _
    // Predicated region
    $region38: #{tpu_custom_call.1} parent=1 // pred_check
      _
    $region39: #{tpu_custom_call.1} parent=1 // pred_check_branch
      %250 = sbr.rel (0) target = $region41
    $region40: #{tpu_custom_call.1} parent=1 // pred_region
      _
    $region41: #{tpu_custom_call.1} parent=1 // pred_fallthru
      _
    %251 = vsyncpa [#allocation3], 1

</llo_original>
